<compile_context>
chip_gen: v7x
topology: tpu7x:2x2x1
jax: 0.10.0
libtpu: 0.0.40
codegen_flags: <defaults>
</compile_context>

<pallas_src>
import math

import jax
import jax.numpy as jnp
import numpy as np
from jax.experimental import pallas as pl
from jax.experimental.pallas import tpu as pltpu


def _rup(n, m):
    return ((n + m - 1) // m) * m


def _layer_norm(x, gamma, beta, eps=1e-12):
    mu = jnp.mean(x, axis=-1, keepdims=True)
    var = jnp.mean((x - mu) ** 2, axis=-1, keepdims=True)
    return (x - mu) * jax.lax.rsqrt(var + eps) * gamma + beta


def _gelu(x):
    return 0.5 * x * (1.0 + jnp.tanh(0.7978845608028654 * (x + 0.044715 * x * x * x)))


def _make_kernel(S, H, F, SEG):
    """Kernel over one batch tile: (BB*S) flattened token rows, BB examples."""

    def kernel(idx_ref, kbias_ref, etab_ref, wslab_ref, w2_ref, bslab_ref, out_ref):
        BS = idx_ref.shape[0]          # BB * S
        BB = BS // S
        VS = etab_ref.shape[0]         # vocab + S
        bf16 = jnp.bfloat16

        def wseg(i):                   # 128-lane-aligned matrix slab segment (bf16)
            return wslab_ref[:, i * SEG:(i + 1) * SEG]            # (H, SEG)

        def brow(i, n=SEG):            # packed bias / gain row (f32)
            return bslab_ref[i:i + 1, 0:n]                        # (1, n)

        # ---- fused embedding + positional lookup (one-hot gather on the MXU) ----
        # TODO(synk): vocab-limited — for a realistic V (>= a few thousand) switch to
        # a scalar-prefetch / DMA row gather instead of a one-hot matmul over V+S cols.
        idx = idx_ref[...]                                        # (BS, 2) int32
        col = jax.lax.broadcasted_iota(jnp.int32, (BS, VS), 1)
        onehot = jnp.logical_or(col == idx[:, 0:1],               # token id
                                col == idx[:, 1:2]                # V + position
                                ).astype(bf16)
        x = jnp.dot(onehot, etab_ref[...],
                    preferred_element_type=jnp.float32)           # (BS, H) f32

        # ---- fused QKV projection (bf16 operands, f32 accumulation) ----
        qkv = jnp.dot(x.astype(bf16), wseg(0),
                      preferred_element_type=jnp.float32) + brow(0)
        qkv3 = qkv.reshape(BB, S, SEG).astype(bf16)               # clean sublane split
        q3 = qkv3[..., 0:H]
        k3 = qkv3[..., H:2 * H]
        v3 = qkv3[..., 2 * H:3 * H]

        # ---- batched per-example single-head attention + additive key-padding bias ----
        scale = 1.0 / float(math.sqrt(H))
        scores = jnp.einsum("bqd,bkd->bqk", q3, k3,
                            preferred_element_type=jnp.float32) * scale  # (BB,S,S)
        scores = scores + kbias_ref[...]                          # (BB,1,S) precomputed bias

        m = jnp.max(scores, axis=-1, keepdims=True)
        p = jnp.exp(scores - m)
        p = p * pl.reciprocal(jnp.sum(p, axis=-1, keepdims=True), approx=True)

        ctx = jnp.einsum("bqk,bkd->bqd", p.astype(bf16), v3,
                         preferred_element_type=jnp.float32)      # (BB,S,H) f32
        ctx = ctx.reshape(BS, H)

        w_opc = wseg(2)                                           # wo | wp | wc segment
        attn = (jnp.dot(ctx.astype(bf16), w_opc,
                        preferred_element_type=jnp.float32)[:, 0:H] + brow(1, H))

        # ---- residual + LN + FFN + residual + LN (all elementwise math in f32) ----
        h1 = _layer_norm(x + attn, brow(2, H), brow(3, H))
        ff = _gelu(jnp.dot(h1.astype(bf16), wseg(1),
                           preferred_element_type=jnp.float32)[:, 0:F] + brow(4, F))
        ff = jnp.dot(ff.astype(bf16), w2_ref[...],
                     preferred_element_type=jnp.float32) + brow(5, H)
        h2 = _layer_norm(h1 + ff, brow(6, H), brow(7, H))

        # ---- select the [CLS] row of every example via a tiny one-hot matmul ----
        rb = jax.lax.broadcasted_iota(jnp.int32, (BB, BS), 0)     # example b
        cj = jax.lax.broadcasted_iota(jnp.int32, (BB, BS), 1)     # flat row j
        sel = (cj == rb * S).astype(bf16)                         # (BB, BS)
        cls = jnp.dot(sel, h2.astype(bf16),
                      preferred_element_type=jnp.float32)         # (BB, H)

        # ---- pooler (tanh) + classifier; lane-dense 128-wide output tile ----
        pooled = jnp.tanh(
            jnp.dot(cls.astype(bf16), w_opc,
                    preferred_element_type=jnp.float32)[:, H:2 * H] + brow(8, H))
        # self.drop: identity at inference.
        # TODO(synk): training-mode dropout (pltpu.prng_random_bits mask) not emitted.
        out_ref[...] = (jnp.dot(pooled.astype(bf16), w_opc,
                                preferred_element_type=jnp.float32) + brow(9))

    return kernel


def model_sentiment_forward(input_ids, attention_mask, params):
    B, S = input_ids.shape
    V, H = params["emb"].shape
    F = params["w1"].shape[1]
    C = params["wc"].shape[1]
    SEG = _rup(max(3 * H, F, 2 * H + C), 128)   # common lane-aligned segment width
    bf16 = jnp.bfloat16

    def padc(w, n):
        return jnp.pad(w, ((0, 0), (0, n - w.shape[1])))

    # ---- weight slab (bf16): [ wq|wk|wv ][ w1 ][ wo|wp|wc ], each SEG lanes ----
    wqkv = jnp.concatenate([params["wq"], params["wk"], params["wv"]], axis=1)   # (H,3H)
    wopc = jnp.concatenate([params["wo"], params["wp"], params["wc"]], axis=1)   # (H,2H+C)
    wslab = jnp.concatenate(
        [padc(m, SEG) for m in (wqkv, params["w1"], wopc)], axis=1).astype(bf16)  # (H,3*SEG)
    w2 = params["w2"].astype(bf16)                                                # (F, H)
    etab = jnp.concatenate([params["emb"], params["pos"][:S]],
                           axis=0).astype(bf16)                                   # (V+S, H)

    # ---- bias slab (f32). Classifier bias sits at column offset 2H so the
    #      lane-dense classifier tile already carries logits+bc at cols 2H:2H+C ----
    bqkv = jnp.concatenate([params["bq"], params["bk"], params["bv"]], axis=1)    # (1,3H)
    brows = [bqkv, params["bo"], params["g1"], params["be1"], params["bf1"],
             params["bf2"], params["g2"], params["be2"], params["bp"],
             jnp.pad(params["bc"], ((0, 0), (2 * H, 0)))]
    bslab = jnp.concatenate([padc(r, SEG) for r in brows], axis=0)
    bslab = jnp.pad(bslab, ((0, _rup(len(brows), 8) - len(brows)), (0, 0)))       # (16, SEG)

    # per-token (token_id, V + position) pairs feeding the in-kernel one-hot gather
    pos_id = jnp.tile(jnp.arange(S, dtype=jnp.int32), B)
    idx2 = jnp.stack([input_ids.reshape(-1).astype(jnp.int32), V + pos_id],
                     axis=1)                                                      # (B*S, 2)
    # additive key-padding bias precomputed here; kernel just adds it to scores
    kbias = ((attention_mask.astype(jnp.float32) - 1.0) * 1e9).reshape(B, 1, S)

    BB = B                    # whole batch per grid step (amortize per-step overhead)
    # TODO(synk): for large B on v7x, split grid=(2,) across both TensorCores
    # (BB = B // 2); requires BB to be a multiple of 8 (or == B) for the output
    # block and a lane-aligned mask layout to satisfy the (8,128)/full-dim rule.
    nsteps = B // BB

    flops = 2 * (B * S * (V + S) * H + B * S * H * 3 * H + 2 * B * S * S * H
                 + B * S * H * H + 2 * B * S * H * F + B * B * S * H
                 + B * H * H + B * H * C)
    cost = pl.CostEstimate(
        flops=flops,
        transcendentals=B * S * S + B * S * F + B * H + 4 * B * S,
        bytes_accessed=(idx2.size * 4 + kbias.size * 4 + etab.size * 2
                        + wslab.size * 2 + w2.size * 2 + bslab.size * 4
                        + B * SEG * 4))

    kernel = _make_kernel(S, H, F, SEG)
    out = pl.pallas_call(
        kernel,
        out_shape=jax.ShapeDtypeStruct((B, SEG), jnp.float32),
        grid=(nsteps,),
        in_specs=[
            pl.BlockSpec((BB * S, 2), lambda b: (b, 0)),      # token/pos ids
            pl.BlockSpec((BB, 1, S), lambda b: (b, 0, 0)),    # additive key-padding bias
            pl.BlockSpec(etab.shape, lambda b: (0, 0)),       # emb+pos table (bf16)
            pl.BlockSpec(wslab.shape, lambda b: (0, 0)),      # packed matrices (bf16)
            pl.BlockSpec(w2.shape, lambda b: (0, 0)),         # FFN-out matrix (bf16)
            pl.BlockSpec(bslab.shape, lambda b: (0, 0)),      # packed biases/gains (f32)
        ],
        out_specs=pl.BlockSpec((BB, SEG), lambda b: (b, 0)),  # lane-dense logits tile
        compiler_params=pltpu.CompilerParams(
            dimension_semantics=("parallel",)),
        cost_estimate=cost,
    )(idx2, kbias, etab, wslab, w2, bslab)
    return out[:, 2 * H:2 * H + C]


def init_params(key, vocab=64, max_seq=8, H=32, F=128, C=3):
    ks = jax.random.split(key, 24)

    def dense(k, i, o):
        return (jax.random.normal(k, (i, o), jnp.float32) / np.sqrt(i)).astype(jnp.float32)

    def vec(k, n):
        return (0.02 * jax.random.normal(k, (1, n), jnp.float32)).astype(jnp.float32)

    return dict(
        emb=(0.02 * jax.random.normal(ks[0], (vocab, H))).astype(jnp.float32),
        pos=(0.02 * jax.random.normal(ks[1], (max_seq, H))).astype(jnp.float32),
        wq=dense(ks[2], H, H), bq=vec(ks[3], H),
        wk=dense(ks[4], H, H), bk=vec(ks[5], H),
        wv=dense(ks[6], H, H), bv=vec(ks[7], H),
        wo=dense(ks[8], H, H), bo=vec(ks[9], H),
        g1=jnp.ones((1, H), jnp.float32), be1=jnp.zeros((1, H), jnp.float32),
        w1=dense(ks[10], H, F), bf1=vec(ks[11], F),
        w2=dense(ks[12], F, H), bf2=vec(ks[13], H),
        g2=jnp.ones((1, H), jnp.float32), be2=jnp.zeros((1, H), jnp.float32),
        wp=dense(ks[14], H, H), bp=vec(ks[15], H),
        wc=dense(ks[16], H, C), bc=vec(ks[17], C),
    )


def reference_forward(input_ids, attention_mask, p):
    B, S = input_ids.shape
    H = p["emb"].shape[1]
    x = p["emb"][input_ids] + p["pos"][None, :S, :]
    mask = attention_mask.astype(jnp.float32)

    q = x @ p["wq"] + p["bq"]
    k = x @ p["wk"] + p["bk"]
    v = x @ p["wv"] + p["bv"]
    scores = jnp.einsum("bqd,bkd->bqk", q, k) / jnp.sqrt(jnp.float32(H))
    scores = scores + (1.0 - mask)[:, None, :] * (-1e9)
    attn_p = jax.nn.softmax(scores, axis=-1)
    attn = jnp.einsum("bqk,bkd->bqd", attn_p, v) @ p["wo"] + p["bo"]
    h1 = _layer_norm(x + attn, p["g1"], p["be1"])
    ff = _gelu(h1 @ p["w1"] + p["bf1"]) @ p["w2"] + p["bf2"]
    h2 = _layer_norm(h1 + ff, p["g2"], p["be2"])
    cls = h2[:, 0, :]
    pooled = jnp.tanh(cls @ p["wp"] + p["bp"])
    return pooled @ p["wc"] + p["bc"]


if __name__ == "__main__":
    B, S, H, F, C, V = 2, 8, 32, 128, 3, 64
    key = jax.random.PRNGKey(0)
    pkey, ikey = jax.random.split(key)

    params = init_params(pkey, vocab=V, max_seq=S, H=H, F=F, C=C)
    input_ids = jax.random.randint(ikey, (B, S), 0, V, dtype=jnp.int32)
    attention_mask = jnp.array([[1, 1, 1, 1, 1, 1, 1, 1],
                                [1, 1, 1, 1, 1, 0, 0, 0]], dtype=jnp.int32)

    logits = model_sentiment_forward(input_ids, attention_mask, params)
    logits = jax.block_until_ready(logits)

    ref = reference_forward(input_ids, attention_mask, params)
    assert logits.shape == (B, C)
    # Kernel runs its matmuls with bf16 operands (f32 accumulation) per the v6e/v7x
    # MXU recommendation; compare against the f32 reference with a bf16-appropriate
    # tolerance (~1% expected relative error through the layer stack).
    np.testing.assert_allclose(np.asarray(logits), np.asarray(ref), rtol=3e-2, atol=3e-2)
    print("KERNEL_OK")
</pallas_src>

<mosaic_0001>
module attributes {stable_mosaic.version = 11 : i64} {
  func.func @kernel(%arg0: i32, %arg1: memref<16x2xi32, #tpu.memory_space<vmem>>, %arg2: memref<2x1x8xf32, #tpu.memory_space<vmem>>, %arg3: memref<72x32xbf16, #tpu.memory_space<vmem>>, %arg4: memref<32x384xbf16, #tpu.memory_space<vmem>>, %arg5: memref<128x32xbf16, #tpu.memory_space<vmem>>, %arg6: memref<16x128xf32, #tpu.memory_space<vmem>>, %arg7: memref<2x128xf32, #tpu.memory_space<vmem>>) attributes {dimension_semantics = [#tpu.dimension_semantics<parallel>], iteration_bounds = array<i64: 1>, scalar_prefetch = 0 : i64, scratch_operands = 0 : i64, tpu.core_type = #tpu.core_type<tc>, window_params = [{transform_indices = @transform_0, window_bounds = array<i64: 16, 2>}, {transform_indices = @transform_1, window_bounds = array<i64: 2, 1, 8>}, {pipeline_mode = #tpu.pipeline_mode<synchronous>, transform_indices = @transform_2, window_bounds = array<i64: 72, 32>}, {pipeline_mode = #tpu.pipeline_mode<synchronous>, transform_indices = @transform_3, window_bounds = array<i64: 32, 384>}, {pipeline_mode = #tpu.pipeline_mode<synchronous>, transform_indices = @transform_4, window_bounds = array<i64: 128, 32>}, {pipeline_mode = #tpu.pipeline_mode<synchronous>, transform_indices = @transform_5, window_bounds = array<i64: 16, 128>}, {transform_indices = @transform_6, window_bounds = array<i64: 2, 128>}]} {
    %c0 = arith.constant 0 : index
    %c0_0 = arith.constant 0 : index
    %0 = vector.load %arg1[%c0, %c0_0] : memref<16x2xi32, #tpu.memory_space<vmem>>, vector<16x2xi32>
    %1 = tpu.iota {dimensions = array<i32: 1>} : vector<16x72xi32>
    %2 = vector.extract_strided_slice %0 {offsets = [0, 0], sizes = [16, 1], strides = [1, 1]} : vector<16x2xi32> to vector<16x1xi32>
    %3 = vector.broadcast %2 : vector<16x1xi32> to vector<16x72xi32>
    %4 = arith.cmpi eq, %1, %3 : vector<16x72xi32>
    %5 = vector.extract_strided_slice %0 {offsets = [0, 1], sizes = [16, 1], strides = [1, 1]} : vector<16x2xi32> to vector<16x1xi32>
    %6 = vector.broadcast %5 : vector<16x1xi32> to vector<16x72xi32>
    %7 = arith.cmpi eq, %1, %6 : vector<16x72xi32>
    %8 = arith.ori %4, %7 : vector<16x72xi1>
    %9 = arith.extui %8 : vector<16x72xi1> to vector<16x72xi32>
    %10 = arith.sitofp %9 : vector<16x72xi32> to vector<16x72xf32>
    %11 = arith.truncf %10 : vector<16x72xf32> to vector<16x72xbf16>
    %c0_1 = arith.constant 0 : index
    %c0_2 = arith.constant 0 : index
    %12 = vector.load %arg3[%c0_1, %c0_2] : memref<72x32xbf16, #tpu.memory_space<vmem>>, vector<72x32xbf16>
    %cst = arith.constant dense<0.000000e+00> : vector<16x32xf32>
    %13 = tpu.matmul %11, %12, %cst {dimension_numbers = #tpu.dot_dimension_numbers<[1], [0], [0], [1], [0, 0, 1, 1], [], []>} : vector<16x72xbf16>, vector<72x32xbf16>, vector<16x32xf32> -> vector<16x32xf32>
    %14 = arith.truncf %13 : vector<16x32xf32> to vector<16x32xbf16>
    %c0_3 = arith.constant 0 : index
    %c0_4 = arith.constant 0 : index
    %15 = vector.load %arg4[%c0_3, %c0_4] : memref<32x384xbf16, #tpu.memory_space<vmem>>, vector<32x128xbf16>
    %cst_5 = arith.constant dense<0.000000e+00> : vector<16x128xf32>
    %16 = tpu.matmul %14, %15, %cst_5 {dimension_numbers = #tpu.dot_dimension_numbers<[1], [0], [0], [1], [0, 0, 1, 1], [], []>} : vector<16x32xbf16>, vector<32x128xbf16>, vector<16x128xf32> -> vector<16x128xf32>
    %c0_6 = arith.constant 0 : index
    %c0_7 = arith.constant 0 : index
    %17 = vector.load %arg6[%c0_6, %c0_7] : memref<16x128xf32, #tpu.memory_space<vmem>>, vector<1x128xf32>
    %18 = vector.broadcast %17 : vector<1x128xf32> to vector<16x128xf32>
    %19 = arith.addf %16, %18 : vector<16x128xf32>
    %20 = vector.shape_cast %19 : vector<16x128xf32> to vector<2x8x128xf32>
    %21 = arith.truncf %20 : vector<2x8x128xf32> to vector<2x8x128xbf16>
    %22 = vector.extract_strided_slice %21 {offsets = [0, 0, 0], sizes = [2, 8, 32], strides = [1, 1, 1]} : vector<2x8x128xbf16> to vector<2x8x32xbf16>
    %23 = vector.extract_strided_slice %21 {offsets = [0, 0, 32], sizes = [2, 8, 32], strides = [1, 1, 1]} : vector<2x8x128xbf16> to vector<2x8x32xbf16>
    %24 = vector.extract_strided_slice %21 {offsets = [0, 0, 64], sizes = [2, 8, 32], strides = [1, 1, 1]} : vector<2x8x128xbf16> to vector<2x8x32xbf16>
    "tpu.trace_start"() <{level = 10 : i32, message = "bqd,bkd->bqk"}> : () -> ()
    %cst_8 = arith.constant dense<0.000000e+00> : vector<2x8x8xf32>
    %25 = tpu.matmul %22, %23, %cst_8 {dimension_numbers = #tpu.dot_dimension_numbers<[2], [2], [1], [1], [0, 0, 0, 1, 1, 1], [0], [0]>} : vector<2x8x32xbf16>, vector<2x8x32xbf16>, vector<2x8x8xf32> -> vector<2x8x8xf32>
    "tpu.trace_stop"() : () -> ()
    %cst_9 = arith.constant 0.176776692 : f32
    %26 = vector.broadcast %cst_9 : f32 to vector<2x8x8xf32>
    %27 = arith.mulf %25, %26 : vector<2x8x8xf32>
    %c0_10 = arith.constant 0 : index
    %c0_11 = arith.constant 0 : index
    %c0_12 = arith.constant 0 : index
    %28 = vector.load %arg2[%c0_10, %c0_11, %c0_12] : memref<2x1x8xf32, #tpu.memory_space<vmem>>, vector<2x1x8xf32>
    %29 = vector.broadcast %28 : vector<2x1x8xf32> to vector<2x8x8xf32>
    %30 = arith.addf %27, %29 : vector<2x8x8xf32>
    %cst_13 = arith.constant dense<0xFF800000> : vector<2x8xf32>
    %31 = vector.multi_reduction <maximumf>, %30, %cst_13 [2] : vector<2x8x8xf32> to vector<2x8xf32>
    %32 = vector.shape_cast %31 : vector<2x8xf32> to vector<2x8x1xf32>
    %33 = vector.broadcast %32 : vector<2x8x1xf32> to vector<2x8x8xf32>
    %34 = arith.subf %30, %33 : vector<2x8x8xf32>
    %35 = math.exp %34 : vector<2x8x8xf32>
    %cst_14 = arith.constant dense<0.000000e+00> : vector<2x8xf32>
    %36 = vector.multi_reduction <add>, %35, %cst_14 [2] : vector<2x8x8xf32> to vector<2x8xf32>
    %37 = vector.shape_cast %36 : vector<2x8xf32> to vector<2x8x1xf32>
    %38 = tpu.reciprocal %37 {approx = true} : vector<2x8x1xf32> -> vector<2x8x1xf32>
    %39 = vector.broadcast %38 : vector<2x8x1xf32> to vector<2x8x8xf32>
    %40 = arith.mulf %35, %39 : vector<2x8x8xf32>
    %41 = arith.truncf %40 : vector<2x8x8xf32> to vector<2x8x8xbf16>
    "tpu.trace_start"() <{level = 10 : i32, message = "bqk,bkd->bqd"}> : () -> ()
    %cst_15 = arith.constant dense<0.000000e+00> : vector<2x8x32xf32>
    %42 = tpu.matmul %41, %24, %cst_15 {dimension_numbers = #tpu.dot_dimension_numbers<[2], [1], [1], [2], [0, 0, 0, 1, 1, 2], [0], [0]>} : vector<2x8x8xbf16>, vector<2x8x32xbf16>, vector<2x8x32xf32> -> vector<2x8x32xf32>
    "tpu.trace_stop"() : () -> ()
    %43 = vector.shape_cast %42 : vector<2x8x32xf32> to vector<16x32xf32>
    %c0_16 = arith.constant 0 : index
    %c256 = arith.constant 256 : index
    %44 = vector.load %arg4[%c0_16, %c256] : memref<32x384xbf16, #tpu.memory_space<vmem>>, vector<32x128xbf16>
    %45 = arith.truncf %43 : vector<16x32xf32> to vector<16x32xbf16>
    %cst_17 = arith.constant dense<0.000000e+00> : vector<16x128xf32>
    %46 = tpu.matmul %45, %44, %cst_17 {dimension_numbers = #tpu.dot_dimension_numbers<[1], [0], [0], [1], [0, 0, 1, 1], [], []>} : vector<16x32xbf16>, vector<32x128xbf16>, vector<16x128xf32> -> vector<16x128xf32>
    %47 = vector.extract_strided_slice %46 {offsets = [0, 0], sizes = [16, 32], strides = [1, 1]} : vector<16x128xf32> to vector<16x32xf32>
    %c1 = arith.constant 1 : index
    %c0_18 = arith.constant 0 : index
    %48 = vector.load %arg6[%c1, %c0_18] : memref<16x128xf32, #tpu.memory_space<vmem>>, vector<1x32xf32>
    %49 = vector.broadcast %48 : vector<1x32xf32> to vector<16x32xf32>
    %50 = arith.addf %47, %49 : vector<16x32xf32>
    %51 = arith.addf %13, %50 : vector<16x32xf32>
    %c2 = arith.constant 2 : index
    %c0_19 = arith.constant 0 : index
    %52 = vector.load %arg6[%c2, %c0_19] : memref<16x128xf32, #tpu.memory_space<vmem>>, vector<1x32xf32>
    %c3 = arith.constant 3 : index
    %c0_20 = arith.constant 0 : index
    %53 = vector.load %arg6[%c3, %c0_20] : memref<16x128xf32, #tpu.memory_space<vmem>>, vector<1x32xf32>
    %cst_21 = arith.constant dense<0.000000e+00> : vector<16xf32>
    %54 = vector.multi_reduction <add>, %51, %cst_21 [1] : vector<16x32xf32> to vector<16xf32>
    %55 = vector.shape_cast %54 : vector<16xf32> to vector<16x1xf32>
    %cst_22 = arith.constant 3.200000e+01 : f32
    %56 = vector.broadcast %cst_22 : f32 to vector<16x1xf32>
    %57 = arith.divf %55, %56 : vector<16x1xf32>
    %58 = vector.broadcast %57 : vector<16x1xf32> to vector<16x32xf32>
    %59 = arith.subf %51, %58 : vector<16x32xf32>
    %60 = arith.mulf %59, %59 : vector<16x32xf32>
    %cst_23 = arith.constant dense<0.000000e+00> : vector<16xf32>
    %61 = vector.multi_reduction <add>, %60, %cst_23 [1] : vector<16x32xf32> to vector<16xf32>
    %62 = vector.shape_cast %61 : vector<16xf32> to vector<16x1xf32>
    %cst_24 = arith.constant 3.200000e+01 : f32
    %63 = vector.broadcast %cst_24 : f32 to vector<16x1xf32>
    %64 = arith.divf %62, %63 : vector<16x1xf32>
    %65 = vector.broadcast %57 : vector<16x1xf32> to vector<16x32xf32>
    %66 = arith.subf %51, %65 : vector<16x32xf32>
    %cst_25 = arith.constant 9.99999996E-13 : f32
    %67 = vector.broadcast %cst_25 : f32 to vector<16x1xf32>
    %68 = arith.addf %64, %67 : vector<16x1xf32>
    %69 = math.rsqrt %68 : vector<16x1xf32>
    %70 = vector.broadcast %69 : vector<16x1xf32> to vector<16x32xf32>
    %71 = arith.mulf %66, %70 : vector<16x32xf32>
    %72 = vector.broadcast %52 : vector<1x32xf32> to vector<16x32xf32>
    %73 = arith.mulf %71, %72 : vector<16x32xf32>
    %74 = vector.broadcast %53 : vector<1x32xf32> to vector<16x32xf32>
    %75 = arith.addf %73, %74 : vector<16x32xf32>
    %76 = arith.truncf %75 : vector<16x32xf32> to vector<16x32xbf16>
    %c0_26 = arith.constant 0 : index
    %c128 = arith.constant 128 : index
    %77 = vector.load %arg4[%c0_26, %c128] : memref<32x384xbf16, #tpu.memory_space<vmem>>, vector<32x128xbf16>
    %cst_27 = arith.constant dense<0.000000e+00> : vector<16x128xf32>
    %78 = tpu.matmul %76, %77, %cst_27 {dimension_numbers = #tpu.dot_dimension_numbers<[1], [0], [0], [1], [0, 0, 1, 1], [], []>} : vector<16x32xbf16>, vector<32x128xbf16>, vector<16x128xf32> -> vector<16x128xf32>
    %c4 = arith.constant 4 : index
    %c0_28 = arith.constant 0 : index
    %79 = vector.load %arg6[%c4, %c0_28] : memref<16x128xf32, #tpu.memory_space<vmem>>, vector<1x128xf32>
    %80 = vector.broadcast %79 : vector<1x128xf32> to vector<16x128xf32>
    %81 = arith.addf %78, %80 : vector<16x128xf32>
    %cst_29 = arith.constant 5.000000e-01 : f32
    %82 = vector.broadcast %cst_29 : f32 to vector<16x128xf32>
    %83 = arith.mulf %82, %81 : vector<16x128xf32>
    %cst_30 = arith.constant 4.471500e-02 : f32
    %84 = vector.broadcast %cst_30 : f32 to vector<16x128xf32>
    %85 = arith.mulf %84, %81 : vector<16x128xf32>
    %86 = arith.mulf %85, %81 : vector<16x128xf32>
    %87 = arith.mulf %86, %81 : vector<16x128xf32>
    %88 = arith.addf %81, %87 : vector<16x128xf32>
    %cst_31 = arith.constant 0.797884583 : f32
    %89 = vector.broadcast %cst_31 : f32 to vector<16x128xf32>
    %90 = arith.mulf %89, %88 : vector<16x128xf32>
    %91 = math.tanh %90 : vector<16x128xf32>
    %cst_32 = arith.constant 1.000000e+00 : f32
    %92 = vector.broadcast %cst_32 : f32 to vector<16x128xf32>
    %93 = arith.addf %92, %91 : vector<16x128xf32>
    %94 = arith.mulf %83, %93 : vector<16x128xf32>
    %95 = arith.truncf %94 : vector<16x128xf32> to vector<16x128xbf16>
    %c0_33 = arith.constant 0 : index
    %c0_34 = arith.constant 0 : index
    %96 = vector.load %arg5[%c0_33, %c0_34] : memref<128x32xbf16, #tpu.memory_space<vmem>>, vector<128x32xbf16>
    %cst_35 = arith.constant dense<0.000000e+00> : vector<16x32xf32>
    %97 = tpu.matmul %95, %96, %cst_35 {dimension_numbers = #tpu.dot_dimension_numbers<[1], [0], [0], [1], [0, 0, 1, 1], [], []>} : vector<16x128xbf16>, vector<128x32xbf16>, vector<16x32xf32> -> vector<16x32xf32>
    %c5 = arith.constant 5 : index
    %c0_36 = arith.constant 0 : index
    %98 = vector.load %arg6[%c5, %c0_36] : memref<16x128xf32, #tpu.memory_space<vmem>>, vector<1x32xf32>
    %99 = vector.broadcast %98 : vector<1x32xf32> to vector<16x32xf32>
    %100 = arith.addf %97, %99 : vector<16x32xf32>
    %101 = arith.addf %75, %100 : vector<16x32xf32>
    %c6 = arith.constant 6 : index
    %c0_37 = arith.constant 0 : index
    %102 = vector.load %arg6[%c6, %c0_37] : memref<16x128xf32, #tpu.memory_space<vmem>>, vector<1x32xf32>
    %c7 = arith.constant 7 : index
    %c0_38 = arith.constant 0 : index
    %103 = vector.load %arg6[%c7, %c0_38] : memref<16x128xf32, #tpu.memory_space<vmem>>, vector<1x32xf32>
    %cst_39 = arith.constant dense<0.000000e+00> : vector<16xf32>
    %104 = vector.multi_reduction <add>, %101, %cst_39 [1] : vector<16x32xf32> to vector<16xf32>
    %105 = vector.shape_cast %104 : vector<16xf32> to vector<16x1xf32>
    %cst_40 = arith.constant 3.200000e+01 : f32
    %106 = vector.broadcast %cst_40 : f32 to vector<16x1xf32>
    %107 = arith.divf %105, %106 : vector<16x1xf32>
    %108 = vector.broadcast %107 : vector<16x1xf32> to vector<16x32xf32>
    %109 = arith.subf %101, %108 : vector<16x32xf32>
    %110 = arith.mulf %109, %109 : vector<16x32xf32>
    %cst_41 = arith.constant dense<0.000000e+00> : vector<16xf32>
    %111 = vector.multi_reduction <add>, %110, %cst_41 [1] : vector<16x32xf32> to vector<16xf32>
    %112 = vector.shape_cast %111 : vector<16xf32> to vector<16x1xf32>
    %cst_42 = arith.constant 3.200000e+01 : f32
    %113 = vector.broadcast %cst_42 : f32 to vector<16x1xf32>
    %114 = arith.divf %112, %113 : vector<16x1xf32>
    %115 = vector.broadcast %107 : vector<16x1xf32> to vector<16x32xf32>
    %116 = arith.subf %101, %115 : vector<16x32xf32>
    %cst_43 = arith.constant 9.99999996E-13 : f32
    %117 = vector.broadcast %cst_43 : f32 to vector<16x1xf32>
    %118 = arith.addf %114, %117 : vector<16x1xf32>
    %119 = math.rsqrt %118 : vector<16x1xf32>
    %120 = vector.broadcast %119 : vector<16x1xf32> to vector<16x32xf32>
    %121 = arith.mulf %116, %120 : vector<16x32xf32>
    %122 = vector.broadcast %102 : vector<1x32xf32> to vector<16x32xf32>
    %123 = arith.mulf %121, %122 : vector<16x32xf32>
    %124 = vector.broadcast %103 : vector<1x32xf32> to vector<16x32xf32>
    %125 = arith.addf %123, %124 : vector<16x32xf32>
    %126 = tpu.iota {dimensions = array<i32: 0>} : vector<2x16xi32>
    %127 = tpu.iota {dimensions = array<i32: 1>} : vector<2x16xi32>
    %c8_i32 = arith.constant 8 : i32
    %128 = vector.broadcast %c8_i32 : i32 to vector<2x16xi32>
    %129 = arith.muli %126, %128 : vector<2x16xi32>
    %130 = arith.cmpi eq, %127, %129 : vector<2x16xi32>
    %131 = arith.extui %130 : vector<2x16xi1> to vector<2x16xi32>
    %132 = arith.sitofp %131 : vector<2x16xi32> to vector<2x16xf32>
    %133 = arith.truncf %132 : vector<2x16xf32> to vector<2x16xbf16>
    %134 = arith.truncf %125 : vector<16x32xf32> to vector<16x32xbf16>
    %cst_44 = arith.constant dense<0.000000e+00> : vector<2x32xf32>
    %135 = tpu.matmul %133, %134, %cst_44 {dimension_numbers = #tpu.dot_dimension_numbers<[1], [0], [0], [1], [0, 0, 1, 1], [], []>} : vector<2x16xbf16>, vector<16x32xbf16>, vector<2x32xf32> -> vector<2x32xf32>
    %136 = arith.truncf %135 : vector<2x32xf32> to vector<2x32xbf16>
    %cst_45 = arith.constant dense<0.000000e+00> : vector<2x128xf32>
    %137 = tpu.matmul %136, %44, %cst_45 {dimension_numbers = #tpu.dot_dimension_numbers<[1], [0], [0], [1], [0, 0, 1, 1], [], []>} : vector<2x32xbf16>, vector<32x128xbf16>, vector<2x128xf32> -> vector<2x128xf32>
    %138 = vector.extract_strided_slice %137 {offsets = [0, 32], sizes = [2, 32], strides = [1, 1]} : vector<2x128xf32> to vector<2x32xf32>
    %c8 = arith.constant 8 : index
    %c0_46 = arith.constant 0 : index
    %139 = vector.load %arg6[%c8, %c0_46] : memref<16x128xf32, #tpu.memory_space<vmem>>, vector<1x32xf32>
    %140 = vector.broadcast %139 : vector<1x32xf32> to vector<2x32xf32>
    %141 = arith.addf %138, %140 : vector<2x32xf32>
    %142 = math.tanh %141 : vector<2x32xf32>
    %143 = arith.truncf %142 : vector<2x32xf32> to vector<2x32xbf16>
    %cst_47 = arith.constant dense<0.000000e+00> : vector<2x128xf32>
    %144 = tpu.matmul %143, %44, %cst_47 {dimension_numbers = #tpu.dot_dimension_numbers<[1], [0], [0], [1], [0, 0, 1, 1], [], []>} : vector<2x32xbf16>, vector<32x128xbf16>, vector<2x128xf32> -> vector<2x128xf32>
    %c9 = arith.constant 9 : index
    %c0_48 = arith.constant 0 : index
    %145 = vector.load %arg6[%c9, %c0_48] : memref<16x128xf32, #tpu.memory_space<vmem>>, vector<1x128xf32>
    %146 = vector.broadcast %145 : vector<1x128xf32> to vector<2x128xf32>
    %147 = arith.addf %144, %146 : vector<2x128xf32>
    %c0_49 = arith.constant 0 : index
    %c0_50 = arith.constant 0 : index
    %148 = vector.load %arg7[%c0_49, %c0_50] : memref<2x128xf32, #tpu.memory_space<vmem>>, vector<2x128xf32>
    tpu.vector_store %arg7[%c0_49, %c0_50], %147 {strides = array<i32>} : memref<2x128xf32, #tpu.memory_space<vmem>>, vector<2x128xf32>,
    return
  }
  func.func @transform_0(%arg0: i32) -> (i32, i32) {
    %c0_i32 = arith.constant 0 : i32
    %c0_i32_0 = arith.constant 0 : i32
    return %arg0, %c0_i32 : i32, i32
  }
  func.func @transform_1(%arg0: i32) -> (i32, i32, i32) {
    %c0_i32 = arith.constant 0 : i32
    %c0_i32_0 = arith.constant 0 : i32
    %c0_i32_1 = arith.constant 0 : i32
    return %arg0, %c0_i32, %c0_i32_0 : i32, i32, i32
  }
  func.func @transform_2(%arg0: i32) -> (i32, i32) {
    %c0_i32 = arith.constant 0 : i32
    %c0_i32_0 = arith.constant 0 : i32
    %c0_i32_1 = arith.constant 0 : i32
    return %c0_i32, %c0_i32_0 : i32, i32
  }
  func.func @transform_3(%arg0: i32) -> (i32, i32) {
    %c0_i32 = arith.constant 0 : i32
    %c0_i32_0 = arith.constant 0 : i32
    %c0_i32_1 = arith.constant 0 : i32
    return %c0_i32, %c0_i32_0 : i32, i32
  }
  func.func @transform_4(%arg0: i32) -> (i32, i32) {
    %c0_i32 = arith.constant 0 : i32
    %c0_i32_0 = arith.constant 0 : i32
    %c0_i32_1 = arith.constant 0 : i32
    return %c0_i32, %c0_i32_0 : i32, i32
  }
  func.func @transform_5(%arg0: i32) -> (i32, i32) {
    %c0_i32 = arith.constant 0 : i32
    %c0_i32_0 = arith.constant 0 : i32
    %c0_i32_1 = arith.constant 0 : i32
    return %c0_i32, %c0_i32_0 : i32, i32
  }
  func.func @transform_6(%arg0: i32) -> (i32, i32) {
    %c0_i32 = arith.constant 0 : i32
    %c0_i32_0 = arith.constant 0 : i32
    return %arg0, %c0_i32 : i32, i32
  }
}

</mosaic_0001>

<llo_original>
// kernel: tpu_custom_call.1
$region0: #{tpu_custom_call.1}
  #allocation0 [shape = 'u32[]', space=smem, size = 0x4, offset = 0x4, fixed_abs, tag = 'smem constant byte address 0x4 - core index']
  #allocation1 [shape = 'u32[144,128]{1,0:T(1,128)}', space=vmem, size = 0x12000, scoped, tag = 'internal scratch']
  %s0 = inlined_call_operand.vmem [shape: s32[16,2], index: 0, kind: input, shape index: {}]
  %s1 = inlined_call_operand.vmem [shape: f32[2,1,8], index: 1, kind: input, shape index: {}]
  %s2 = inlined_call_operand.vmem [shape: bf16[72,32], index: 2, kind: input, shape index: {}]
  %s3 = inlined_call_operand.vmem [shape: bf16[32,384], index: 3, kind: input, shape index: {}]
  %s4 = inlined_call_operand.vmem [shape: bf16[128,32], index: 4, kind: input, shape index: {}]
  %s5 = inlined_call_operand.vmem [shape: f32[16,128], index: 5, kind: input, shape index: {}]
  %s6 = inlined_call_operand.hbm [shape: f32[2,128], index: 6, kind: output, shape index: {}]
  %s7 = sld [smem:[#allocation0]]
  $region34: #{tpu_custom_call.1} parent=0
    _
  %s9 = ssub.s32 1, %s7
  %s10 = scalar_select 0, %s9, %s7
  $region1: #{tpu_custom_call.1} parent=0
    #allocation2 [shape = 'u8[1024]{0}', space=vmem, size = 0x400, scoped, tag = 'output window, operand 0, single buffered']
    #allocation3 [shape = 's32[1]{0}', space=sflag, size = 0x4, scoped, tag = 'scoped memory for tpu_custom_call.1']
    %11 = vsyncpa [#allocation3], 0
    // Predicated region
    $region2: #{tpu_custom_call.1} parent=1 // pred_check
      _
    $region3: #{tpu_custom_call.1} parent=1 // pred_check_branch
      %13 = sbr.rel (0) target = $region5
    $region4: #{tpu_custom_call.1} parent=1 // pred_region
      _
    $region5: #{tpu_custom_call.1} parent=1 // pred_fallthru
      _
    // Predicated region
    $region6: #{tpu_custom_call.1} parent=1 // pred_check
      _
    $region7: #{tpu_custom_call.1} parent=1 // pred_check_branch
      %15 = sbr.rel (0) target = $region9
    $region8: #{tpu_custom_call.1} parent=1 // pred_region
      _
    $region9: #{tpu_custom_call.1} parent=1 // pred_fallthru
      _
    // Predicated region
    $region10: #{tpu_custom_call.1} parent=1 // pred_check
      _
    $region11: #{tpu_custom_call.1} parent=1 // pred_check_branch
      %17 = sbr.rel (0) target = $region13
    $region12: #{tpu_custom_call.1} parent=1 // pred_region
      _
    $region13: #{tpu_custom_call.1} parent=1 // pred_fallthru
      _
    // Predicated region
    $region14: #{tpu_custom_call.1} parent=1 // pred_check
      _
    $region15: #{tpu_custom_call.1} parent=1 // pred_check_branch
      %19 = sbr.rel (0) target = $region17
    $region16: #{tpu_custom_call.1} parent=1 // pred_region
      _
    $region17: #{tpu_custom_call.1} parent=1 // pred_fallthru
      _
    // Predicated region
    $region18: #{tpu_custom_call.1} parent=1 // pred_check
      _
    $region19: #{tpu_custom_call.1} parent=1 // pred_check_branch
      %21 = sbr.rel (0) target = $region21
    $region20: #{tpu_custom_call.1} parent=1 // pred_region
      _
    $region21: #{tpu_custom_call.1} parent=1 // pred_fallthru
      _
    // Predicated region
    $region22: #{tpu_custom_call.1} parent=1 // pred_check
      _
    $region23: #{tpu_custom_call.1} parent=1 // pred_check_branch
      %23 = sbr.rel (0) target = $region25
    $region24: #{tpu_custom_call.1} parent=1 // pred_region
      _
    $region25: #{tpu_custom_call.1} parent=1 // pred_fallthru
      _
    %v25 = vld [vmem:[%s0] sm:$0xff]
    %v26 = vld [vmem:[%s0 + $0x8] sm:$0xff]
    %v27 = vlaneseq
    %v28 = vand.u32 %v27, 127
    %29 = vset.pattern.permute.xlu0 0
    %30 = vperm.xlu0 %29, %v25
    %v31 = vpop.permute.xlu0 %30
    %32 = vset.pattern.permute.xlu0 0
    %33 = vperm.xlu0 %32, %v26
    %v34 = vpop.permute.xlu0 %33
    %vm35 = vcmp.eq.s32.totalorder %v28, %v31
    %vm36 = vcmp.eq.s32.totalorder %v28, %v34
    %37 = vset.pattern.permute.xlu0 1
    %38 = vperm.xlu0 %37, %v25
    %v39 = vpop.permute.xlu0 %38
    %40 = vset.pattern.permute.xlu0 1
    %41 = vperm.xlu0 %40, %v26
    %v42 = vpop.permute.xlu0 %41
    %vm43 = vcmp.eq.s32.totalorder %v28, %v39
    %vm44 = vcmp.eq.s32.totalorder %v28, %v42
    %vm45 = vmor %vm35, %vm43
    %vm46 = vmor %vm36, %vm44
    %v47 = vsel %vm45, 1, 0
    %v48 = vsel %vm46, 1, 0
    %v49 = vcvt.s32.f32 %v47
    %v50 = vcvt.s32.f32 %v48
    %v51 = vpack.c.bf16 %v50, %v49
    %v52 = vld [vmem:[%s2] sm:$0xf]
    %v53 = vld [vmem:[%s2 + $0x4] sm:$0xf]
    %v54 = vld [vmem:[%s2 + $0x8] sm:$0xf]
    %v55 = vld [vmem:[%s2 + $0xc] sm:$0xf]
    %v56 = vld [vmem:[%s2 + $0x10] sm:$0xf]
    %v57 = vld [vmem:[%s2 + $0x14] sm:$0xf]
    %v58 = vld [vmem:[%s2 + $0x18] sm:$0xf]
    %v59 = vld [vmem:[%s2 + $0x1c] sm:$0xf]
    %v60 = vld [vmem:[%s2 + $0x20] sm:$0xf]
    %v70 = vunpack.c.l.b16 %v52
    %v71 = vunpack.c.l.b16 %v53
    %v72 = vunpack.c.l.b16 %v54
    %v73 = vunpack.c.l.b16 %v55
    %v74 = vunpack.c.l.b16 %v56
    %v75 = vunpack.c.l.b16 %v57
    %v76 = vunpack.c.l.b16 %v58
    %v77 = vunpack.c.l.b16 %v59
    %v78 = vunpack.c.l.b16 %v60
    %v79 = vpack.c.b16 %v71, %v70
    %v80 = vpack.c.b16 %v73, %v72
    %v81 = vpack.c.b16 %v75, %v74
    %v82 = vpack.c.b16 %v77, %v76
    %v83 = vpack.c.b16 %v78, %v78
    %vm88 = vcmask 588800
    %v90 = vsel %vm88, %v51, 0
    %vm92 = vcmask 1043456
    %v94 = vsel %vm92, %v83, 0
    %96 = vmatprep.subr.bf16.mxu0 0
    %97 = vmatpush1.bf16.msra.mxu0 %v79
    %98 = vmatprep.subr.bf16.mxu0 0
    %99 = vmatpush1.bf16.msra.mxu0 %v80
    %100 = vmatprep.subr.bf16.mxu0 0
    %101 = vmatpush1.bf16.msra.mxu0 %v81
    %102 = vmatprep.subr.bf16.mxu0 0
    %103 = vmatpush1.bf16.msra.mxu0 %v82
    %104 = vmatprep.subr.bf16.mxu0 0
    %105 = vmatpush1.bf16.msra.mxu0 %v94
    %106 = vmatprep.subr.bf16.mxu0 0
    %107 = vmatpush1.bf16.msra.mxu0 0
    %108 = vmatprep.subr.bf16.mxu0 0
    %109 = vmatpush1.bf16.msra.mxu0 0
    %110 = vmatprep.subr.bf16.mxu0 0
    %111 = vmatpush1.bf16.msra.mxu0 0
    %112 = vmatprep.subr.bf16.mxu0 0
    %113 = vmatpush1.bf16.msra.mxu0 0
    %114 = vmatprep.subr.bf16.mxu0 0
    %115 = vmatpush1.bf16.msra.mxu0 0
    %116 = vmatprep.subr.bf16.mxu0 0
    %117 = vmatpush1.bf16.msra.mxu0 0
    %118 = vmatprep.subr.bf16.mxu0 0
    %119 = vmatpush1.bf16.msra.mxu0 0
    %120 = vmatprep.subr.bf16.mxu0 0
    %121 = vmatpush1.bf16.msra.mxu0 0
    %122 = vmatprep.subr.bf16.mxu0 0
    %123 = vmatpush1.bf16.msra.mxu0 0
    %124 = vmatprep.subr.bf16.mxu0 0
    %125 = vmatpush1.bf16.msra.mxu0 0
    %126 = vmatprep.subr.bf16.mxu0 0
    %127 = vmatpush1.bf16.msra.mxu0 0
    %128 = vmatprep.mubr.bf16.mxu0 0
    %129 = vmatmul.mubr.bf16.gmra.mrb[0].mxu0 %v90
    %v130 = vpop.f32.mrb[0].mxu0
    %v131 = vadd.f32 0.0, %v130
    %v132 = vpop.f32.mrb[0].mxu0
    %v133 = vpop.f32.mrb[0].mxu0
    %v134 = vadd.f32 0.0, %v133
    %v135 = vpop.f32.mrb[0].mxu0
    %136 = vdwg.mxu0
    %v137 = vpack.c.bf16 %v134, %v131
    %v138 = vld [vmem:[%s3] sm:$0xf]
    %v139 = vld [vmem:[%s3 + $0xc] sm:$0xf]
    %v140 = vld [vmem:[%s3 + $0x18] sm:$0xf]
    %v141 = vld [vmem:[%s3 + $0x24] sm:$0xf]
    %v142 = vld [vmem:[%s5] sm:$0x1]
    %v143 = vlaneseq
    %v144 = vshrl.u32 %v143, 7
    %v145 = vsub.s32 0, %v144
    %v146 = vrot.slane %v142, %v145
    %v151 = vunpack.c.l.b16 %v138
    %v152 = vunpack.c.l.b16 %v139
    %v153 = vunpack.c.l.b16 %v140
    %v154 = vunpack.c.l.b16 %v141
    %v155 = vpack.c.b16 %v152, %v151
    %v156 = vpack.c.b16 %v154, %v153
    %vm159 = vcmask 261120
    %v161 = vsel %vm159, %v137, 0
    %163 = vmatprep.subr.bf16.mxu0 0
    %164 = vmatpush1.bf16.msra.mxu0 %v155
    %165 = vmatprep.subr.bf16.mxu0 0
    %166 = vmatpush1.bf16.msra.mxu0 %v156
    %167 = vmatprep.subr.bf16.mxu0 0
    %168 = vmatpush1.bf16.msra.mxu0 0
    %169 = vmatprep.subr.bf16.mxu0 0
    %170 = vmatpush1.bf16.msra.mxu0 0
    %171 = vmatprep.subr.bf16.mxu0 0
    %172 = vmatpush1.bf16.msra.mxu0 0
    %173 = vmatprep.subr.bf16.mxu0 0
    %174 = vmatpush1.bf16.msra.mxu0 0
    %175 = vmatprep.subr.bf16.mxu0 0
    %176 = vmatpush1.bf16.msra.mxu0 0
    %177 = vmatprep.subr.bf16.mxu0 0
    %178 = vmatpush1.bf16.msra.mxu0 0
    %179 = vmatprep.subr.bf16.mxu0 0
    %180 = vmatpush1.bf16.msra.mxu0 0
    %181 = vmatprep.subr.bf16.mxu0 0
    %182 = vmatpush1.bf16.msra.mxu0 0
    %183 = vmatprep.subr.bf16.mxu0 0
    %184 = vmatpush1.bf16.msra.mxu0 0
    %185 = vmatprep.subr.bf16.mxu0 0
    %186 = vmatpush1.bf16.msra.mxu0 0
    %187 = vmatprep.subr.bf16.mxu0 0
    %188 = vmatpush1.bf16.msra.mxu0 0
    %189 = vmatprep.subr.bf16.mxu0 0
    %190 = vmatpush1.bf16.msra.mxu0 0
    %191 = vmatprep.subr.bf16.mxu0 0
    %192 = vmatpush1.bf16.msra.mxu0 0
    %193 = vmatprep.subr.bf16.mxu0 0
    %194 = vmatpush1.bf16.msra.mxu0 0
    %195 = vmatprep.mubr.bf16.mxu0 0
    %196 = vmatmul.mubr.bf16.gmra.mrb[0].mxu0 %v161
    %v197 = vpop.f32.mrb[0].mxu0
    %v198 = vadd.f32 %v146, %v197
    %v199 = vpop.f32.mrb[0].mxu0
    %v200 = vpop.f32.mrb[0].mxu0
    %v201 = vadd.f32 %v146, %v200
    %v202 = vpop.f32.mrb[0].mxu0
    %203 = vdwg.mxu0
    %v204 = vpack.c.bf16 %v198, %v198
    %v205 = vpack.c.bf16 %v201, %v201
    %207 = vrot.lane.b32.xlu0 %v204, 96
    %v208 = vpop.permute.xlu0 %207
    %v210 = vsel %vm159, %v204, 0
    %v213 = vsel %vm159, %v208, 0
    %215 = vmatprep.subr.bf16.mxu0 0
    %216 = vmatpush1.bf16.xpose.msra.mxu0 %v213
    %217 = vmatprep.subr.bf16.mxu0 0
    %218 = vmatpush1.bf16.xpose.msra.mxu0 0
    %219 = vmatprep.subr.bf16.mxu0 0
    %220 = vmatpush1.bf16.xpose.msra.mxu0 0
    %221 = vmatprep.subr.bf16.mxu0 0
    %222 = vmatpush1.bf16.xpose.msra.mxu0 0
    %223 = vmatprep.subr.bf16.mxu0 0
    %224 = vmatpush1.bf16.xpose.msra.mxu0 0
    %225 = vmatprep.subr.bf16.mxu0 0
    %226 = vmatpush1.bf16.xpose.msra.mxu0 0
    %227 = vmatprep.subr.bf16.mxu0 0
    %228 = vmatpush1.bf16.xpose.msra.mxu0 0
    %229 = vmatprep.subr.bf16.mxu0 0
    %230 = vmatpush1.bf16.xpose.msra.mxu0 0
    %231 = vmatprep.subr.bf16.mxu0 0
    %232 = vmatpush1.bf16.xpose.msra.mxu0 0
    %233 = vmatprep.subr.bf16.mxu0 0
    %234 = vmatpush1.bf16.xpose.msra.mxu0 0
    %235 = vmatprep.subr.bf16.mxu0 0
    %236 = vmatpush1.bf16.xpose.msra.mxu0 0
    %237 = vmatprep.subr.bf16.mxu0 0
    %238 = vmatpush1.bf16.xpose.msra.mxu0 0
    %239 = vmatprep.subr.bf16.mxu0 0
    %240 = vmatpush1.bf16.xpose.msra.mxu0 0
    %241 = vmatprep.subr.bf16.mxu0 0
    %242 = vmatpush1.bf16.xpose.msra.mxu0 0
    %243 = vmatprep.subr.bf16.mxu0 0
    %244 = vmatpush1.bf16.xpose.msra.mxu0 0
    %245 = vmatprep.subr.bf16.mxu0 0
    %246 = vmatpush1.bf16.xpose.msra.mxu0 0
    %247 = vmatprep.mubr.bf16.mxu0 0
    %248 = vmatmul.mubr.bf16.gmra.mrb[0].mxu0 %v210
    %v249 = vpop.f32.mrb[0].mxu0
    %v250 = vadd.f32 0.0, %v249
    %v251 = vpop.f32.mrb[0].mxu0
    %v252 = vpop.f32.mrb[0].mxu0
    %v253 = vpop.f32.mrb[0].mxu0
    %254 = vdwg.mxu0
    %256 = vrot.lane.b32.xlu0 %v205, 96
    %v257 = vpop.permute.xlu0 %256
    %v259 = vsel %vm159, %v205, 0
    %v262 = vsel %vm159, %v257, 0
    %264 = vmatprep.subr.bf16.mxu0 0
    %265 = vmatpush1.bf16.xpose.msra.mxu0 %v262
    %266 = vmatprep.subr.bf16.mxu0 0
    %267 = vmatpush1.bf16.xpose.msra.mxu0 0
    %268 = vmatprep.subr.bf16.mxu0 0
    %269 = vmatpush1.bf16.xpose.msra.mxu0 0
    %270 = vmatprep.subr.bf16.mxu0 0
    %271 = vmatpush1.bf16.xpose.msra.mxu0 0
    %272 = vmatprep.subr.bf16.mxu0 0
    %273 = vmatpush1.bf16.xpose.msra.mxu0 0
    %274 = vmatprep.subr.bf16.mxu0 0
    %275 = vmatpush1.bf16.xpose.msra.mxu0 0
    %276 = vmatprep.subr.bf16.mxu0 0
    %277 = vmatpush1.bf16.xpose.msra.mxu0 0
    %278 = vmatprep.subr.bf16.mxu0 0
    %279 = vmatpush1.bf16.xpose.msra.mxu0 0
    %280 = vmatprep.subr.bf16.mxu0 0
    %281 = vmatpush1.bf16.xpose.msra.mxu0 0
    %282 = vmatprep.subr.bf16.mxu0 0
    %283 = vmatpush1.bf16.xpose.msra.mxu0 0
    %284 = vmatprep.subr.bf16.mxu0 0
    %285 = vmatpush1.bf16.xpose.msra.mxu0 0
    %286 = vmatprep.subr.bf16.mxu0 0
    %287 = vmatpush1.bf16.xpose.msra.mxu0 0
    %288 = vmatprep.subr.bf16.mxu0 0
    %289 = vmatpush1.bf16.xpose.msra.mxu0 0
    %290 = vmatprep.subr.bf16.mxu0 0
    %291 = vmatpush1.bf16.xpose.msra.mxu0 0
    %292 = vmatprep.subr.bf16.mxu0 0
    %293 = vmatpush1.bf16.xpose.msra.mxu0 0
    %294 = vmatprep.subr.bf16.mxu0 0
    %295 = vmatpush1.bf16.xpose.msra.mxu0 0
    %296 = vmatprep.mubr.bf16.mxu0 0
    %297 = vmatmul.mubr.bf16.gmra.mrb[0].mxu0 %v259
    %v298 = vpop.f32.mrb[0].mxu0
    %v299 = vadd.f32 0.0, %v298
    %v300 = vpop.f32.mrb[0].mxu0
    %v301 = vpop.f32.mrb[0].mxu0
    %v302 = vpop.f32.mrb[0].mxu0
    %303 = vdwg.mxu0
    %v304 = vmul.f32 %v250, 0.17677669
    %v305 = vmul.f32 %v299, 0.17677669
    %v306 = vld [vmem:[%s1] sm:$0x1]
    %v307 = vld [vmem:[%s1 + $0x1] sm:$0x1]
    %v310 = vlaneseq
    %v311 = vshrl.u32 %v310, 7
    %v312 = vsub.s32 0, %v311
    %v313 = vrot.slane %v306, %v312
    %v314 = vlaneseq
    %v315 = vshrl.u32 %v314, 7
    %v316 = vsub.s32 0, %v315
    %v317 = vrot.slane %v307, %v316
    %v320 = vadd.f32 %v304, %v313
    %v321 = vadd.f32 %v305, %v317
    %vm322 = vcmask 64512
    %v323 = vsel %vm322, %v320, -inf
    %324 = vmax.xlane.f32.xlu0 %v323
    %v325 = vpop.xlane.xlu0 %324
    %v326 = vsel %vm322, %v321, -inf
    %327 = vmax.xlane.f32.xlu0 %v326
    %v328 = vpop.xlane.xlu0 %327
    %v329 = vsub.f32 %v320, %v325
    %v330 = vsub.f32 %v321, %v328
    %v331 = vmul.f32 %v329, 1.442695
    %v332 = vpow.pop %v331
    %v333 = vmul.f32 %v330, 1.442695
    %v334 = vpow.pop %v333
    %v335 = vsel %vm322, %v332, 0.0
    %336 = vadd.xlane.f32.xlu0 %v335
    %v337 = vpop.xlane.xlu0 %336
    %v338 = vsel %vm322, %v334, 0.0
    %339 = vadd.xlane.f32.xlu0 %v338
    %v340 = vpop.xlane.xlu0 %339
    %v341 = vrcp.pop %v337
    %v342 = vrcp.pop %v340
    %v343 = vmul.f32 %v332, %v341
    %v344 = vmul.f32 %v334, %v342
    %v345 = vpack.c.bf16 %v343, %v343
    %v346 = vpack.c.bf16 %v344, %v344
    %347 = vrot.lane.b32.xlu0 %v204, 64
    %v348 = vpop.permute.xlu0 %347
    %v350 = vsel %vm322, %v345, 0
    %v353 = vsel %vm92, %v348, 0
    %355 = vmatprep.subr.bf16.mxu0 0
    %356 = vmatpush1.bf16.msra.mxu0 %v353
    %357 = vmatprep.subr.bf16.mxu0 0
    %358 = vmatpush1.bf16.msra.mxu0 0
    %359 = vmatprep.subr.bf16.mxu0 0
    %360 = vmatpush1.bf16.msra.mxu0 0
    %361 = vmatprep.subr.bf16.mxu0 0
    %362 = vmatpush1.bf16.msra.mxu0 0
    %363 = vmatprep.subr.bf16.mxu0 0
    %364 = vmatpush1.bf16.msra.mxu0 0
    %365 = vmatprep.subr.bf16.mxu0 0
    %366 = vmatpush1.bf16.msra.mxu0 0
    %367 = vmatprep.subr.bf16.mxu0 0
    %368 = vmatpush1.bf16.msra.mxu0 0
    %369 = vmatprep.subr.bf16.mxu0 0
    %370 = vmatpush1.bf16.msra.mxu0 0
    %371 = vmatprep.subr.bf16.mxu0 0
    %372 = vmatpush1.bf16.msra.mxu0 0
    %373 = vmatprep.subr.bf16.mxu0 0
    %374 = vmatpush1.bf16.msra.mxu0 0
    %375 = vmatprep.subr.bf16.mxu0 0
    %376 = vmatpush1.bf16.msra.mxu0 0
    %377 = vmatprep.subr.bf16.mxu0 0
    %378 = vmatpush1.bf16.msra.mxu0 0
    %379 = vmatprep.subr.bf16.mxu0 0
    %380 = vmatpush1.bf16.msra.mxu0 0
    %381 = vmatprep.subr.bf16.mxu0 0
    %382 = vmatpush1.bf16.msra.mxu0 0
    %383 = vmatprep.subr.bf16.mxu0 0
    %384 = vmatpush1.bf16.msra.mxu0 0
    %385 = vmatprep.subr.bf16.mxu0 0
    %386 = vmatpush1.bf16.msra.mxu0 0
    %387 = vmatprep.mubr.bf16.mxu0 0
    %388 = vmatmul.mubr.bf16.gmra.mrb[0].mxu0 %v350
    %v389 = vpop.f32.mrb[0].mxu0
    %v390 = vadd.f32 0.0, %v389
    %v391 = vpop.f32.mrb[0].mxu0
    %v392 = vpop.f32.mrb[0].mxu0
    %v393 = vpop.f32.mrb[0].mxu0
    %394 = vdwg.mxu0
    %395 = vrot.lane.b32.xlu0 %v205, 64
    %v396 = vpop.permute.xlu0 %395
    %v398 = vsel %vm322, %v346, 0
    %v401 = vsel %vm92, %v396, 0
    %403 = vmatprep.subr.bf16.mxu0 0
    %404 = vmatpush1.bf16.msra.mxu0 %v401
    %405 = vmatprep.subr.bf16.mxu0 0
    %406 = vmatpush1.bf16.msra.mxu0 0
    %407 = vmatprep.subr.bf16.mxu0 0
    %408 = vmatpush1.bf16.msra.mxu0 0
    %409 = vmatprep.subr.bf16.mxu0 0
    %410 = vmatpush1.bf16.msra.mxu0 0
    %411 = vmatprep.subr.bf16.mxu0 0
    %412 = vmatpush1.bf16.msra.mxu0 0
    %413 = vmatprep.subr.bf16.mxu0 0
    %414 = vmatpush1.bf16.msra.mxu0 0
    %415 = vmatprep.subr.bf16.mxu0 0
    %416 = vmatpush1.bf16.msra.mxu0 0
    %417 = vmatprep.subr.bf16.mxu0 0
    %418 = vmatpush1.bf16.msra.mxu0 0
    %419 = vmatprep.subr.bf16.mxu0 0
    %420 = vmatpush1.bf16.msra.mxu0 0
    %421 = vmatprep.subr.bf16.mxu0 0
    %422 = vmatpush1.bf16.msra.mxu0 0
    %423 = vmatprep.subr.bf16.mxu0 0
    %424 = vmatpush1.bf16.msra.mxu0 0
    %425 = vmatprep.subr.bf16.mxu0 0
    %426 = vmatpush1.bf16.msra.mxu0 0
    %427 = vmatprep.subr.bf16.mxu0 0
    %428 = vmatpush1.bf16.msra.mxu0 0
    %429 = vmatprep.subr.bf16.mxu0 0
    %430 = vmatpush1.bf16.msra.mxu0 0
    %431 = vmatprep.subr.bf16.mxu0 0
    %432 = vmatpush1.bf16.msra.mxu0 0
    %433 = vmatprep.subr.bf16.mxu0 0
    %434 = vmatpush1.bf16.msra.mxu0 0
    %435 = vmatprep.mubr.bf16.mxu0 0
    %436 = vmatmul.mubr.bf16.gmra.mrb[0].mxu0 %v398
    %v437 = vpop.f32.mrb[0].mxu0
    %v438 = vadd.f32 0.0, %v437
    %v439 = vpop.f32.mrb[0].mxu0
    %v440 = vpop.f32.mrb[0].mxu0
    %v441 = vpop.f32.mrb[0].mxu0
    %442 = vdwg.mxu0
    %v443 = vld [vmem:[%s3 + $0x8] sm:$0xf]
    %v444 = vld [vmem:[%s3 + $0x14] sm:$0xf]
    %v445 = vld [vmem:[%s3 + $0x20] sm:$0xf]
    %v446 = vld [vmem:[%s3 + $0x2c] sm:$0xf]
    %v447 = vpack.c.bf16 %v438, %v390
    %v452 = vunpack.c.l.b16 %v443
    %v453 = vunpack.c.l.b16 %v444
    %v454 = vunpack.c.l.b16 %v445
    %v455 = vunpack.c.l.b16 %v446
    %v456 = vpack.c.b16 %v453, %v452
    %v457 = vpack.c.b16 %v455, %v454
    %v461 = vsel %vm159, %v447, 0
    %463 = vmatprep.subr.bf16.mxu0 0
    %464 = vmatpush1.bf16.msra.mxu0 %v456
    %465 = vmatprep.subr.bf16.mxu0 0
    %466 = vmatpush1.bf16.msra.mxu0 %v457
    %467 = vmatprep.subr.bf16.mxu0 0
    %468 = vmatpush1.bf16.msra.mxu0 0
    %469 = vmatprep.subr.bf16.mxu0 0
    %470 = vmatpush1.bf16.msra.mxu0 0
    %471 = vmatprep.subr.bf16.mxu0 0
    %472 = vmatpush1.bf16.msra.mxu0 0
    %473 = vmatprep.subr.bf16.mxu0 0
    %474 = vmatpush1.bf16.msra.mxu0 0
    %475 = vmatprep.subr.bf16.mxu0 0
    %476 = vmatpush1.bf16.msra.mxu0 0
    %477 = vmatprep.subr.bf16.mxu0 0
    %478 = vmatpush1.bf16.msra.mxu0 0
    %479 = vmatprep.subr.bf16.mxu0 0
    %480 = vmatpush1.bf16.msra.mxu0 0
    %481 = vmatprep.subr.bf16.mxu0 0
    %482 = vmatpush1.bf16.msra.mxu0 0
    %483 = vmatprep.subr.bf16.mxu0 0
    %484 = vmatpush1.bf16.msra.mxu0 0
    %485 = vmatprep.subr.bf16.mxu0 0
    %486 = vmatpush1.bf16.msra.mxu0 0
    %487 = vmatprep.subr.bf16.mxu0 0
    %488 = vmatpush1.bf16.msra.mxu0 0
    %489 = vmatprep.subr.bf16.mxu0 0
    %490 = vmatpush1.bf16.msra.mxu0 0
    %491 = vmatprep.subr.bf16.mxu0 0
    %492 = vmatpush1.bf16.msra.mxu0 0
    %493 = vmatprep.subr.bf16.mxu0 0
    %494 = vmatpush1.bf16.msra.mxu0 0
    %495 = vmatprep.mubr.bf16.mxu0 0
    %496 = vmatmul.mubr.bf16.gmra.mrb[0].mxu0 %v461
    %v497 = vpop.f32.mrb[0].mxu0
    %v498 = vadd.f32 0.0, %v497
    %v499 = vpop.f32.mrb[0].mxu0
    %v500 = vpop.f32.mrb[0].mxu0
    %v501 = vadd.f32 0.0, %v500
    %v502 = vpop.f32.mrb[0].mxu0
    %503 = vdwg.mxu0
    %v504 = vld [vmem:[%s5 + $0x1] sm:$0x1]
    %v505 = vlaneseq
    %v506 = vshrl.u32 %v505, 7
    %v507 = vsub.s32 0, %v506
    %v508 = vrot.slane %v504, %v507
    %v509 = vadd.f32 %v498, %v508
    %v510 = vadd.f32 %v501, %v508
    %v511 = vadd.f32 %v131, %v509
    %v512 = vadd.f32 %v134, %v510
    %v513 = vld [vmem:[%s5 + $0x2] sm:$0x1]
    %v514 = vld [vmem:[%s5 + $0x3] sm:$0x1]
    %v515 = vsel %vm159, %v511, 0.0
    %516 = vadd.xlane.f32.xlu0 %v515
    %v517 = vpop.xlane.xlu0 %516
    %v518 = vsel %vm159, %v512, 0.0
    %519 = vadd.xlane.f32.xlu0 %v518
    %v520 = vpop.xlane.xlu0 %519
    %v521 = vrcp.pop 32.0
    %v522 = vmul.f32 %v517, %v521
    %v523 = vmul.f32 %v520, %v521
    %v524 = vsub.f32 %v511, %v522
    %v525 = vsub.f32 %v512, %v523
    %v526 = vmul.f32 %v524, %v524
    %v527 = vmul.f32 %v525, %v525
    %v528 = vsel %vm159, %v526, 0.0
    %529 = vadd.xlane.f32.xlu0 %v528
    %v530 = vpop.xlane.xlu0 %529
    %v531 = vsel %vm159, %v527, 0.0
    %532 = vadd.xlane.f32.xlu0 %v531
    %v533 = vpop.xlane.xlu0 %532
    %v534 = vmul.f32 %v530, %v521
    %v535 = vmul.f32 %v533, %v521
    %v536 = vadd.f32 %v534, 1e-12
    %v537 = vadd.f32 %v535, 1e-12
    %v538 = vrsqrt.pop %v536
    %v539 = vrsqrt.pop %v537
    %v540 = vmul.f32 %v524, %v538
    %v541 = vmul.f32 %v525, %v539
    %v542 = vlaneseq
    %v543 = vshrl.u32 %v542, 7
    %v544 = vsub.s32 0, %v543
    %v545 = vrot.slane %v513, %v544
    %v546 = vmul.f32 %v540, %v545
    %v547 = vmul.f32 %v541, %v545
    %v548 = vlaneseq
    %v549 = vshrl.u32 %v548, 7
    %v550 = vsub.s32 0, %v549
    %v551 = vrot.slane %v514, %v550
    %v552 = vadd.f32 %v546, %v551
    %v553 = vadd.f32 %v547, %v551
    %v554 = vpack.c.bf16 %v553, %v552
    %v555 = vld [vmem:[%s3 + $0x4] sm:$0xf]
    %v556 = vld [vmem:[%s3 + $0x10] sm:$0xf]
    %v557 = vld [vmem:[%s3 + $0x1c] sm:$0xf]
    %v558 = vld [vmem:[%s3 + $0x28] sm:$0xf]
    %v559 = vld [vmem:[%s5 + $0x4] sm:$0x1]
    %v560 = vlaneseq
    %v561 = vshrl.u32 %v560, 7
    %v562 = vsub.s32 0, %v561
    %v563 = vrot.slane %v559, %v562
    %v568 = vunpack.c.l.b16 %v555
    %v569 = vunpack.c.l.b16 %v556
    %v570 = vunpack.c.l.b16 %v557
    %v571 = vunpack.c.l.b16 %v558
    %v572 = vpack.c.b16 %v569, %v568
    %v573 = vpack.c.b16 %v571, %v570
    %v577 = vsel %vm159, %v554, 0
    %579 = vmatprep.subr.bf16.mxu0 0
    %580 = vmatpush1.bf16.msra.mxu0 %v572
    %581 = vmatprep.subr.bf16.mxu0 0
    %582 = vmatpush1.bf16.msra.mxu0 %v573
    %583 = vmatprep.subr.bf16.mxu0 0
    %584 = vmatpush1.bf16.msra.mxu0 0
    %585 = vmatprep.subr.bf16.mxu0 0
    %586 = vmatpush1.bf16.msra.mxu0 0
    %587 = vmatprep.subr.bf16.mxu0 0
    %588 = vmatpush1.bf16.msra.mxu0 0
    %589 = vmatprep.subr.bf16.mxu0 0
    %590 = vmatpush1.bf16.msra.mxu0 0
    %591 = vmatprep.subr.bf16.mxu0 0
    %592 = vmatpush1.bf16.msra.mxu0 0
    %593 = vmatprep.subr.bf16.mxu0 0
    %594 = vmatpush1.bf16.msra.mxu0 0
    %595 = vmatprep.subr.bf16.mxu0 0
    %596 = vmatpush1.bf16.msra.mxu0 0
    %597 = vmatprep.subr.bf16.mxu0 0
    %598 = vmatpush1.bf16.msra.mxu0 0
    %599 = vmatprep.subr.bf16.mxu0 0
    %600 = vmatpush1.bf16.msra.mxu0 0
    %601 = vmatprep.subr.bf16.mxu0 0
    %602 = vmatpush1.bf16.msra.mxu0 0
    %603 = vmatprep.subr.bf16.mxu0 0
    %604 = vmatpush1.bf16.msra.mxu0 0
    %605 = vmatprep.subr.bf16.mxu0 0
    %606 = vmatpush1.bf16.msra.mxu0 0
    %607 = vmatprep.subr.bf16.mxu0 0
    %608 = vmatpush1.bf16.msra.mxu0 0
    %609 = vmatprep.subr.bf16.mxu0 0
    %610 = vmatpush1.bf16.msra.mxu0 0
    %611 = vmatprep.mubr.bf16.mxu0 0
    %612 = vmatmul.mubr.bf16.gmra.mrb[0].mxu0 %v577
    %v613 = vpop.f32.mrb[0].mxu0
    %v614 = vadd.f32 %v563, %v613
    %v615 = vpop.f32.mrb[0].mxu0
    %v616 = vpop.f32.mrb[0].mxu0
    %v617 = vadd.f32 %v563, %v616
    %v618 = vpop.f32.mrb[0].mxu0
    %619 = vdwg.mxu0
    %v620 = vmul.f32 %v614, 0.5
    %v621 = vmul.f32 %v617, 0.5
    %v622 = vmul.f32 %v614, 0.044715
    %v623 = vmul.f32 %v617, 0.044715
    %v624 = vmul.f32 %v622, %v614
    %v625 = vmul.f32 %v623, %v617
    %v626 = vmul.f32 %v624, %v614
    %v627 = vmul.f32 %v625, %v617
    %v628 = vadd.f32 %v614, %v626
    %v629 = vadd.f32 %v617, %v627
    %v630 = vmul.f32 %v628, 0.7978846
    %v631 = vmul.f32 %v629, 0.7978846
    %v632 = vtanh.pop %v630
    %v633 = vtanh.pop %v631
    %v634 = vadd.f32 %v632, 1.0
    %v635 = vadd.f32 %v633, 1.0
    %v636 = vmul.f32 %v620, %v634
    %v637 = vmul.f32 %v621, %v635
    %v638 = vpack.c.bf16 %v637, %v636
    %v639 = vld [vmem:[%s4] sm:$0xf]
    %v640 = vld [vmem:[%s4 + $0x4] sm:$0xf]
    %v641 = vld [vmem:[%s4 + $0x8] sm:$0xf]
    %v642 = vld [vmem:[%s4 + $0xc] sm:$0xf]
    %v643 = vld [vmem:[%s4 + $0x10] sm:$0xf]
    %v644 = vld [vmem:[%s4 + $0x14] sm:$0xf]
    %v645 = vld [vmem:[%s4 + $0x18] sm:$0xf]
    %v646 = vld [vmem:[%s4 + $0x1c] sm:$0xf]
    %v647 = vld [vmem:[%s4 + $0x20] sm:$0xf]
    %v648 = vld [vmem:[%s4 + $0x24] sm:$0xf]
    %v649 = vld [vmem:[%s4 + $0x28] sm:$0xf]
    %v650 = vld [vmem:[%s4 + $0x2c] sm:$0xf]
    %v651 = vld [vmem:[%s4 + $0x30] sm:$0xf]
    %v652 = vld [vmem:[%s4 + $0x34] sm:$0xf]
    %v653 = vld [vmem:[%s4 + $0x38] sm:$0xf]
    %v654 = vld [vmem:[%s4 + $0x3c] sm:$0xf]
    %v655 = vld [vmem:[%s5 + $0x5] sm:$0x1]
    %v656 = vlaneseq
    %v657 = vshrl.u32 %v656, 7
    %v658 = vsub.s32 0, %v657
    %v659 = vrot.slane %v655, %v658
    %v676 = vunpack.c.l.b16 %v639
    %v677 = vunpack.c.l.b16 %v640
    %v678 = vunpack.c.l.b16 %v641
    %v679 = vunpack.c.l.b16 %v642
    %v680 = vunpack.c.l.b16 %v643
    %v681 = vunpack.c.l.b16 %v644
    %v682 = vunpack.c.l.b16 %v645
    %v683 = vunpack.c.l.b16 %v646
    %v684 = vunpack.c.l.b16 %v647
    %v685 = vunpack.c.l.b16 %v648
    %v686 = vunpack.c.l.b16 %v649
    %v687 = vunpack.c.l.b16 %v650
    %v688 = vunpack.c.l.b16 %v651
    %v689 = vunpack.c.l.b16 %v652
    %v690 = vunpack.c.l.b16 %v653
    %v691 = vunpack.c.l.b16 %v654
    %v692 = vpack.c.b16 %v677, %v676
    %v693 = vpack.c.b16 %v679, %v678
    %v694 = vpack.c.b16 %v681, %v680
    %v695 = vpack.c.b16 %v683, %v682
    %v696 = vpack.c.b16 %v685, %v684
    %v697 = vpack.c.b16 %v687, %v686
    %v698 = vpack.c.b16 %v689, %v688
    %v699 = vpack.c.b16 %v691, %v690
    %708 = vmatprep.subr.bf16.mxu0 0
    %709 = vmatpush1.bf16.msra.mxu0 %v692
    %710 = vmatprep.subr.bf16.mxu0 0
    %711 = vmatpush1.bf16.msra.mxu0 %v693
    %712 = vmatprep.subr.bf16.mxu0 0
    %713 = vmatpush1.bf16.msra.mxu0 %v694
    %714 = vmatprep.subr.bf16.mxu0 0
    %715 = vmatpush1.bf16.msra.mxu0 %v695
    %716 = vmatprep.subr.bf16.mxu0 0
    %717 = vmatpush1.bf16.msra.mxu0 %v696
    %718 = vmatprep.subr.bf16.mxu0 0
    %719 = vmatpush1.bf16.msra.mxu0 %v697
    %720 = vmatprep.subr.bf16.mxu0 0
    %721 = vmatpush1.bf16.msra.mxu0 %v698
    %722 = vmatprep.subr.bf16.mxu0 0
    %723 = vmatpush1.bf16.msra.mxu0 %v699
    %724 = vmatprep.subr.bf16.mxu0 0
    %725 = vmatpush1.bf16.msra.mxu0 0
    %726 = vmatprep.subr.bf16.mxu0 0
    %727 = vmatpush1.bf16.msra.mxu0 0
    %728 = vmatprep.subr.bf16.mxu0 0
    %729 = vmatpush1.bf16.msra.mxu0 0
    %730 = vmatprep.subr.bf16.mxu0 0
    %731 = vmatpush1.bf16.msra.mxu0 0
    %732 = vmatprep.subr.bf16.mxu0 0
    %733 = vmatpush1.bf16.msra.mxu0 0
    %734 = vmatprep.subr.bf16.mxu0 0
    %735 = vmatpush1.bf16.msra.mxu0 0
    %736 = vmatprep.subr.bf16.mxu0 0
    %737 = vmatpush1.bf16.msra.mxu0 0
    %738 = vmatprep.subr.bf16.mxu0 0
    %739 = vmatpush1.bf16.msra.mxu0 0
    %740 = vmatprep.mubr.bf16.mxu0 0
    %741 = vmatmul.mubr.bf16.gmra.mrb[0].mxu0 %v638
    %v742 = vpop.f32.mrb[0].mxu0
    %v743 = vadd.f32 %v659, %v742
    %v744 = vpop.f32.mrb[0].mxu0
    %v745 = vpop.f32.mrb[0].mxu0
    %v746 = vadd.f32 %v659, %v745
    %v747 = vpop.f32.mrb[0].mxu0
    %748 = vdwg.mxu0
    %v749 = vadd.f32 %v552, %v743
    %v750 = vadd.f32 %v553, %v746
    %v751 = vld [vmem:[%s5 + $0x6] sm:$0x1]
    %v752 = vld [vmem:[%s5 + $0x7] sm:$0x1]
    %v753 = vsel %vm159, %v749, 0.0
    %754 = vadd.xlane.f32.xlu0 %v753
    %v755 = vpop.xlane.xlu0 %754
    %v756 = vsel %vm159, %v750, 0.0
    %757 = vadd.xlane.f32.xlu0 %v756
    %v758 = vpop.xlane.xlu0 %757
    %v759 = vmul.f32 %v755, %v521
    %v760 = vmul.f32 %v758, %v521
    %v761 = vsub.f32 %v749, %v759
    %v762 = vsub.f32 %v750, %v760
    %v763 = vmul.f32 %v761, %v761
    %v764 = vmul.f32 %v762, %v762
    %v765 = vsel %vm159, %v763, 0.0
    %766 = vadd.xlane.f32.xlu0 %v765
    %v767 = vpop.xlane.xlu0 %766
    %v768 = vsel %vm159, %v764, 0.0
    %769 = vadd.xlane.f32.xlu0 %v768
    %v770 = vpop.xlane.xlu0 %769
    %v771 = vmul.f32 %v767, %v521
    %v772 = vmul.f32 %v770, %v521
    %v773 = vadd.f32 %v771, 1e-12
    %v774 = vadd.f32 %v772, 1e-12
    %v775 = vrsqrt.pop %v773
    %v776 = vrsqrt.pop %v774
    %v777 = vmul.f32 %v761, %v775
    %v778 = vmul.f32 %v762, %v776
    %v779 = vlaneseq
    %v780 = vshrl.u32 %v779, 7
    %v781 = vsub.s32 0, %v780
    %v782 = vrot.slane %v751, %v781
    %v783 = vmul.f32 %v777, %v782
    %v784 = vmul.f32 %v778, %v782
    %v785 = vlaneseq
    %v786 = vshrl.u32 %v785, 7
    %v787 = vsub.s32 0, %v786
    %v788 = vrot.slane %v752, %v787
    %v789 = vadd.f32 %v783, %v788
    %v790 = vadd.f32 %v784, %v788
    %v791 = vlaneseq
    %v792 = vshrl.u32 %v791, 7
    %v793 = vmul.u32 %v792, 8
    %vm794 = vcmp.eq.s32.totalorder %v28, %v793
    %v795 = vsel %vm794, 1, 0
    %v796 = vcvt.s32.f32 %v795
    %v797 = vpack.c.bf16 %v796, %v796
    %v798 = vpack.c.bf16 %v790, %v789
    %vm799 = vcmask 130048
    %v801 = vsel %vm799, %v797, 0
    %803 = vmatprep.subr.bf16.mxu0 0
    %804 = vmatpush1.bf16.msra.mxu0 %v798
    %805 = vmatprep.subr.bf16.mxu0 0
    %806 = vmatpush1.bf16.msra.mxu0 0
    %807 = vmatprep.subr.bf16.mxu0 0
    %808 = vmatpush1.bf16.msra.mxu0 0
    %809 = vmatprep.subr.bf16.mxu0 0
    %810 = vmatpush1.bf16.msra.mxu0 0
    %811 = vmatprep.subr.bf16.mxu0 0
    %812 = vmatpush1.bf16.msra.mxu0 0
    %813 = vmatprep.subr.bf16.mxu0 0
    %814 = vmatpush1.bf16.msra.mxu0 0
    %815 = vmatprep.subr.bf16.mxu0 0
    %816 = vmatpush1.bf16.msra.mxu0 0
    %817 = vmatprep.subr.bf16.mxu0 0
    %818 = vmatpush1.bf16.msra.mxu0 0
    %819 = vmatprep.subr.bf16.mxu0 0
    %820 = vmatpush1.bf16.msra.mxu0 0
    %821 = vmatprep.subr.bf16.mxu0 0
    %822 = vmatpush1.bf16.msra.mxu0 0
    %823 = vmatprep.subr.bf16.mxu0 0
    %824 = vmatpush1.bf16.msra.mxu0 0
    %825 = vmatprep.subr.bf16.mxu0 0
    %826 = vmatpush1.bf16.msra.mxu0 0
    %827 = vmatprep.subr.bf16.mxu0 0
    %828 = vmatpush1.bf16.msra.mxu0 0
    %829 = vmatprep.subr.bf16.mxu0 0
    %830 = vmatpush1.bf16.msra.mxu0 0
    %831 = vmatprep.subr.bf16.mxu0 0
    %832 = vmatpush1.bf16.msra.mxu0 0
    %833 = vmatprep.subr.bf16.mxu0 0
    %834 = vmatpush1.bf16.msra.mxu0 0
    %835 = vmatprep.mubr.bf16.mxu0 0
    %836 = vmatmul.mubr.bf16.gmra.mrb[0].mxu0 %v801
    %v837 = vpop.f32.mrb[0].mxu0
    %v838 = vadd.f32 0.0, %v837
    %v839 = vpop.f32.mrb[0].mxu0
    %v840 = vpop.f32.mrb[0].mxu0
    %v841 = vpop.f32.mrb[0].mxu0
    %842 = vdwg.mxu0
    %v843 = vpack.c.bf16 %v838, %v838
    %v845 = vsel %vm159, %v843, 0
    %847 = vmatprep.subr.bf16.mxu0 0
    %848 = vmatpush1.bf16.msra.mxu0 %v456
    %849 = vmatprep.subr.bf16.mxu0 0
    %850 = vmatpush1.bf16.msra.mxu0 %v457
    %851 = vmatprep.subr.bf16.mxu0 0
    %852 = vmatpush1.bf16.msra.mxu0 0
    %853 = vmatprep.subr.bf16.mxu0 0
    %854 = vmatpush1.bf16.msra.mxu0 0
    %855 = vmatprep.subr.bf16.mxu0 0
    %856 = vmatpush1.bf16.msra.mxu0 0
    %857 = vmatprep.subr.bf16.mxu0 0
    %858 = vmatpush1.bf16.msra.mxu0 0
    %859 = vmatprep.subr.bf16.mxu0 0
    %860 = vmatpush1.bf16.msra.mxu0 0
    %861 = vmatprep.subr.bf16.mxu0 0
    %862 = vmatpush1.bf16.msra.mxu0 0
    %863 = vmatprep.subr.bf16.mxu0 0
    %864 = vmatpush1.bf16.msra.mxu0 0
    %865 = vmatprep.subr.bf16.mxu0 0
    %866 = vmatpush1.bf16.msra.mxu0 0
    %867 = vmatprep.subr.bf16.mxu0 0
    %868 = vmatpush1.bf16.msra.mxu0 0
    %869 = vmatprep.subr.bf16.mxu0 0
    %870 = vmatpush1.bf16.msra.mxu0 0
    %871 = vmatprep.subr.bf16.mxu0 0
    %872 = vmatpush1.bf16.msra.mxu0 0
    %873 = vmatprep.subr.bf16.mxu0 0
    %874 = vmatpush1.bf16.msra.mxu0 0
    %875 = vmatprep.subr.bf16.mxu0 0
    %876 = vmatpush1.bf16.msra.mxu0 0
    %877 = vmatprep.subr.bf16.mxu0 0
    %878 = vmatpush1.bf16.msra.mxu0 0
    %879 = vmatprep.mubr.bf16.mxu0 0
    %880 = vmatmul.mubr.bf16.gmra.mrb[0].mxu0 %v845
    %v881 = vpop.f32.mrb[0].mxu0
    %v882 = vadd.f32 0.0, %v881
    %v883 = vpop.f32.mrb[0].mxu0
    %v884 = vpop.f32.mrb[0].mxu0
    %v885 = vpop.f32.mrb[0].mxu0
    %886 = vdwg.mxu0
    %v887 = vld [vmem:[%s5 + $0x8] sm:$0x1]
    %v888 = vlaneseq
    %v889 = vshrl.u32 %v888, 7
    %v890 = vsub.s32 0, %v889
    %v891 = vrot.slane %v887, %v890
    %893 = vrot.lane.b32.xlu0 %v891, 32
    %v894 = vpop.permute.xlu0 %893
    %v896 = vadd.f32 %v882, %v894
    %v897 = vtanh.pop %v896
    %v898 = vpack.c.bf16 %v897, %v897
    %v899 = vld [vmem:[%s5 + $0x9] sm:$0x1]
    %v900 = vlaneseq
    %v901 = vshrl.u32 %v900, 7
    %v902 = vsub.s32 0, %v901
    %v903 = vrot.slane %v899, %v902
    %905 = vrot.lane.b32.xlu0 %v898, 96
    %v906 = vpop.permute.xlu0 %905
    %v908 = vsel %vm159, %v906, 0
    %910 = vmatprep.subr.bf16.mxu0 0
    %911 = vmatpush1.bf16.msra.mxu0 %v456
    %912 = vmatprep.subr.bf16.mxu0 0
    %913 = vmatpush1.bf16.msra.mxu0 %v457
    %914 = vmatprep.subr.bf16.mxu0 0
    %915 = vmatpush1.bf16.msra.mxu0 0
    %916 = vmatprep.subr.bf16.mxu0 0
    %917 = vmatpush1.bf16.msra.mxu0 0
    %918 = vmatprep.subr.bf16.mxu0 0
    %919 = vmatpush1.bf16.msra.mxu0 0
    %920 = vmatprep.subr.bf16.mxu0 0
    %921 = vmatpush1.bf16.msra.mxu0 0
    %922 = vmatprep.subr.bf16.mxu0 0
    %923 = vmatpush1.bf16.msra.mxu0 0
    %924 = vmatprep.subr.bf16.mxu0 0
    %925 = vmatpush1.bf16.msra.mxu0 0
    %926 = vmatprep.subr.bf16.mxu0 0
    %927 = vmatpush1.bf16.msra.mxu0 0
    %928 = vmatprep.subr.bf16.mxu0 0
    %929 = vmatpush1.bf16.msra.mxu0 0
    %930 = vmatprep.subr.bf16.mxu0 0
    %931 = vmatpush1.bf16.msra.mxu0 0
    %932 = vmatprep.subr.bf16.mxu0 0
    %933 = vmatpush1.bf16.msra.mxu0 0
    %934 = vmatprep.subr.bf16.mxu0 0
    %935 = vmatpush1.bf16.msra.mxu0 0
    %936 = vmatprep.subr.bf16.mxu0 0
    %937 = vmatpush1.bf16.msra.mxu0 0
    %938 = vmatprep.subr.bf16.mxu0 0
    %939 = vmatpush1.bf16.msra.mxu0 0
    %940 = vmatprep.subr.bf16.mxu0 0
    %941 = vmatpush1.bf16.msra.mxu0 0
    %942 = vmatprep.mubr.bf16.mxu0 0
    %943 = vmatmul.mubr.bf16.gmra.mrb[0].mxu0 %v908
    %v944 = vpop.f32.mrb[0].mxu0
    %v945 = vadd.f32 %v903, %v944
    %v946 = vpop.f32.mrb[0].mxu0
    %v947 = vpop.f32.mrb[0].mxu0
    %v948 = vpop.f32.mrb[0].mxu0
    %949 = vdwg.mxu0
    %950 = vst [vmem:[#allocation2] sm:$0x3] %v945
    // Predicated region
    $region26: #{tpu_custom_call.1} parent=1 // pred_check
      _
    $region27: #{tpu_custom_call.1} parent=1 // pred_check_branch
      %952 = sbr.rel (0) target = $region29
    $region28: #{tpu_custom_call.1} parent=1 // pred_region
      %s954 = ssub.s32 32, 32
      %955 = vsyncadd [#allocation3], %s954
      %s957 = sshll.u32 [#allocation2], 4
      %s958 = int_to_ptr.vmem [resolvable:$true] %s957
      %960 = dma.vmem_to_hbm [thread:$0]  %s958, 32, %s6, [#allocation3]
    $region29: #{tpu_custom_call.1} parent=1 // pred_fallthru
      _
    // Predicated region
    $region30: #{tpu_custom_call.1} parent=1 // pred_check
      _
    $region31: #{tpu_custom_call.1} parent=1 // pred_check_branch
      %962 = sbr.rel (0) target = $region33
    $region32: #{tpu_custom_call.1} parent=1 // pred_region
      %963 = dma.done [#allocation3], 32
    $region33: #{tpu_custom_call.1} parent=1 // pred_fallthru
      _
    %964 = vsyncpa [#allocation3], 1

</llo_original>
